<compile_context>
chip_gen: v6e
topology: v6e:2x2x1
jax: 0.10.0
libtpu: 0.0.40
codegen_flags: <defaults>
</compile_context>

<pallas_src>
import functools

import jax
import jax.numpy as jnp
from jax.experimental import pallas as pl
from jax.experimental.pallas import tpu as pltpu


# ---------------------------------------------------------------------------
# Pallas kernel: channel LayerNorm + per-sample affine on one (C, tHW) tile
# ---------------------------------------------------------------------------
def _cln_kernel(x_ref, wb_ref, o_ref, *, eps):
    # x_ref : (1, C, tHW)    wb_ref : (1, C, 2) f32    o_ref : (1, C, tHW)
    x = x_ref[0].astype(jnp.float32)                     # (C, tHW)
    inv_c = 1.0 / x.shape[0]
    mu = jnp.sum(x, axis=0, keepdims=True) * inv_c       # (1, tHW) mean over C
    xc = x - mu                                          # needed for output anyway
    var = jnp.sum(xc * xc, axis=0, keepdims=True) * inv_c  # biased variance over C
    r = jax.lax.rsqrt(var + eps)                         # EUP, (1, tHW)

    wb = wb_ref[0]                                       # (C, 2) f32
    w = wb[:, 0:1]                                       # (C, 1)
    b = wb[:, 1:2]                                       # (C, 1)
    o_ref[0] = (xc * (w * r) + b).astype(o_ref.dtype)


def _pick_tile(HW, C, itemsize):
    """Pick a lane-dense spatial tile width and the padded spatial extent."""
    LANE = 128
    hw_pad = ((HW + LANE - 1) // LANE) * LANE
    # VMEM budget per step (in+out double-buffered, f32 compute copies) kept
    # comfortably under the v5e 16 MiB / v7x 32 MiB scoped-VMEM defaults.
    budget_bytes = 8 * 1024 * 1024
    per_lane_bytes = C * (2 * itemsize + 2 * 4)          # 2x in + 2x out (f32 worst case)
    max_thw = max(LANE, (budget_bytes // per_lane_bytes // LANE) * LANE)
    cap_blocks = max(1, min(max_thw, 2048) // LANE)      # 512-2048 lanes is the roofline plateau
    k = hw_pad // LANE
    best = 1
    for d in range(1, cap_blocks + 1):                   # largest divisor -> no extra padding
        if k % d == 0:
            best = d
    return best * LANE, hw_pad


def clayernorm2d_pallas(x, weights, bias, eps=1e-6):
    """x: (N, C, H, W) NCHW; weights/bias: (N, C) per-sample affine params."""
    N, C, H, W = x.shape
    HW = H * W
    itemsize = jnp.dtype(x.dtype).itemsize

    thw, hw_pad = _pick_tile(HW, C, itemsize)

    xr = x.reshape(N, C, HW)
    if hw_pad != HW:
        # Padded columns only ever feed their own (discarded) output columns:
        # the reduction is over C, so zero padding is mathematically inert.
        xr = jnp.pad(xr, ((0, 0), (0, 0), (0, hw_pad - HW)))

    # Pack (weight, bias) -> one (N, C, 2) side input (one small DMA per step).
    wb = jnp.stack([weights, bias], axis=-1).astype(jnp.float32)

    grid = (N, hw_pad // thw)

    # Advisory cost: memory-bound elementwise+reduce kernel.
    cost = pl.CostEstimate(
        flops=7 * N * C * HW,
        transcendentals=N * HW,
        bytes_accessed=2 * N * C * HW * itemsize + wb.size * 4,
    )

    # Scoped-VMEM request: our tiles are small by construction; 32 MiB is
    # >= the default on every generation and < physical VMEM on v7x (64 MiB).
    needed = 2 * 2 * C * thw * itemsize + 4 * C * thw * 4 + 4 * C * 2 * 4 + (1 << 20)
    vmem_limit = max(needed, 32 * 1024 * 1024)

    out = pl.pallas_call(
        functools.partial(_cln_kernel, eps=eps),
        out_shape=jax.ShapeDtypeStruct((N, C, hw_pad), x.dtype),
        grid=grid,
        in_specs=[
            pl.BlockSpec((1, C, thw), lambda n, h: (n, 0, h)),
            pl.BlockSpec((1, C, 2), lambda n, h: (n, 0, 0)),
        ],
        out_specs=pl.BlockSpec((1, C, thw), lambda n, h: (n, 0, h)),
        compiler_params=pltpu.CompilerParams(
            dimension_semantics=("parallel", "parallel"),
            vmem_limit_bytes=int(vmem_limit),
        ),
        cost_estimate=cost,
    )(xr, wb)

    if hw_pad != HW:
        out = out[:, :, :HW]
    return out.reshape(N, C, H, W)


# ---------------------------------------------------------------------------
# multiLinear glue (4 Linear layers, outputs summed) -- fused into one matmul
# ---------------------------------------------------------------------------
_MULTILINEAR_IN_DIMS = (1, 2, 4, 8)   # nn.Linear(1,C), (2,C), (4,C), (8,C)


def init_multilinear_params(key, channels):
    params = []
    for i, in_dim in enumerate(_MULTILINEAR_IN_DIMS):
        kw, kb = jax.random.split(jax.random.fold_in(key, i))
        w = jax.random.normal(kw, (channels, in_dim), jnp.float32) * 0.1
        b = jax.random.normal(kb, (channels,), jnp.float32) * 0.1
        params.append((w, b))
    return params


def multilinear_apply(params, label_list):
    """Equivalent to sum_i Linear_i(label_i) but as a single fused matmul."""
    labels = jnp.concatenate(label_list, axis=-1)                    # (N, 15)
    w_stack = jnp.concatenate([w.T for (w, _) in params], axis=0)    # (15, C)
    b_sum = sum(b for (_, b) in params)                              # (C,)
    return labels @ w_stack + b_sum                                  # (N, C)


def clayernorm2d_forward(x, label_list, weight_params, bias_params, eps=1e-6):
    weights = multilinear_apply(weight_params, label_list)   # (N, C)
    bias = multilinear_apply(bias_params, label_list)        # (N, C)
    return clayernorm2d_pallas(x, weights, bias, eps)


# ---------------------------------------------------------------------------
# Pure-JAX reference (mirrors CLayerNormFunction.forward) for sanity check
# ---------------------------------------------------------------------------
def _ref_forward(x, weights, bias, eps):
    mu = jnp.mean(x, axis=1, keepdims=True)
    var = jnp.mean((x - mu) ** 2, axis=1, keepdims=True)
    y = (x - mu) / jnp.sqrt(var + eps)
    return weights[:, :, None, None] * y + bias[:, :, None, None]


if __name__ == "__main__":
    key = jax.random.PRNGKey(0)
    k_x, k_lbl, k_wp, k_bp = jax.random.split(key, 4)

    N, C, H, W = 2, 4, 16, 16
    eps = 1e-6

    x = jax.random.normal(k_x, (N, C, H, W), jnp.float32)
    label_list = [
        jax.random.normal(jax.random.fold_in(k_lbl, i), (N, d), jnp.float32)
        for i, d in enumerate(_MULTILINEAR_IN_DIMS)
    ]

    weight_params = init_multilinear_params(k_wp, C)
    bias_params = init_multilinear_params(k_bp, C)

    out = clayernorm2d_forward(x, label_list, weight_params, bias_params, eps)
    out = jax.block_until_ready(out)

    # Sanity check against pure-JAX reference of the PyTorch semantics.
    weights = multilinear_apply(weight_params, label_list)
    bias = multilinear_apply(bias_params, label_list)
    ref = _ref_forward(x, weights, bias, eps)
    assert out.shape == (N, C, H, W)
    assert jnp.max(jnp.abs(out - ref)) < 1e-5

    print("KERNEL_OK")
</pallas_src>

<mosaic_0001>
module attributes {stable_mosaic.version = 11 : i64} {
  func.func @_cln_kernel(%arg0: i32, %arg1: i32, %arg2: memref<1x4x256xf32, #tpu.memory_space<vmem>>, %arg3: memref<1x4x2xf32, #tpu.memory_space<vmem>>, %arg4: memref<1x4x256xf32, #tpu.memory_space<vmem>>) attributes {dimension_semantics = [#tpu.dimension_semantics<parallel>, #tpu.dimension_semantics<parallel>], iteration_bounds = array<i64: 2, 1>, scalar_prefetch = 0 : i64, scratch_operands = 0 : i64, tpu.core_type = #tpu.core_type<tc>, window_params = [{transform_indices = @transform_0, window_bounds = array<i64: 1, 4, 256>}, {transform_indices = @transform_1, window_bounds = array<i64: 1, 4, 2>}, {transform_indices = @transform_2, window_bounds = array<i64: 1, 4, 256>}]} {
    %c0 = arith.constant 0 : index
    %c0_0 = arith.constant 0 : index
    %c0_1 = arith.constant 0 : index
    %0 = vector.load %arg2[%c0, %c0_0, %c0_1] : memref<1x4x256xf32, #tpu.memory_space<vmem>>, vector<1x4x256xf32>
    %1 = vector.shape_cast %0 : vector<1x4x256xf32> to vector<4x256xf32>
    %cst = arith.constant dense<0.000000e+00> : vector<256xf32>
    %2 = vector.multi_reduction <add>, %1, %cst [0] : vector<4x256xf32> to vector<256xf32>
    %3 = vector.shape_cast %2 : vector<256xf32> to vector<1x256xf32>
    %cst_2 = arith.constant 2.500000e-01 : f32
    %4 = vector.broadcast %cst_2 : f32 to vector<1x256xf32>
    %5 = arith.mulf %3, %4 : vector<1x256xf32>
    %6 = vector.broadcast %5 : vector<1x256xf32> to vector<4x256xf32>
    %7 = arith.subf %1, %6 : vector<4x256xf32>
    %8 = arith.mulf %7, %7 : vector<4x256xf32>
    %cst_3 = arith.constant dense<0.000000e+00> : vector<256xf32>
    %9 = vector.multi_reduction <add>, %8, %cst_3 [0] : vector<4x256xf32> to vector<256xf32>
    %10 = vector.shape_cast %9 : vector<256xf32> to vector<1x256xf32>
    %cst_4 = arith.constant 2.500000e-01 : f32
    %11 = vector.broadcast %cst_4 : f32 to vector<1x256xf32>
    %12 = arith.mulf %10, %11 : vector<1x256xf32>
    %cst_5 = arith.constant 9.99999997E-7 : f32
    %13 = vector.broadcast %cst_5 : f32 to vector<1x256xf32>
    %14 = arith.addf %12, %13 : vector<1x256xf32>
    %15 = math.rsqrt %14 : vector<1x256xf32>
    %c0_6 = arith.constant 0 : index
    %c0_7 = arith.constant 0 : index
    %c0_8 = arith.constant 0 : index
    %16 = vector.load %arg3[%c0_6, %c0_7, %c0_8] : memref<1x4x2xf32, #tpu.memory_space<vmem>>, vector<1x4x2xf32>
    %17 = vector.shape_cast %16 : vector<1x4x2xf32> to vector<4x2xf32>
    %18 = vector.extract_strided_slice %17 {offsets = [0, 0], sizes = [4, 1], strides = [1, 1]} : vector<4x2xf32> to vector<4x1xf32>
    %19 = vector.extract_strided_slice %17 {offsets = [0, 1], sizes = [4, 1], strides = [1, 1]} : vector<4x2xf32> to vector<4x1xf32>
    %20 = vector.broadcast %18 : vector<4x1xf32> to vector<4x256xf32>
    %21 = vector.broadcast %15 : vector<1x256xf32> to vector<4x256xf32>
    %22 = arith.mulf %20, %21 : vector<4x256xf32>
    %23 = arith.mulf %7, %22 : vector<4x256xf32>
    %24 = vector.broadcast %19 : vector<4x1xf32> to vector<4x256xf32>
    %25 = arith.addf %23, %24 : vector<4x256xf32>
    %c0_9 = arith.constant 0 : index
    %c0_10 = arith.constant 0 : index
    %c0_11 = arith.constant 0 : index
    %26 = vector.load %arg4[%c0_9, %c0_10, %c0_11] : memref<1x4x256xf32, #tpu.memory_space<vmem>>, vector<1x4x256xf32>
    %27 = vector.shape_cast %26 : vector<1x4x256xf32> to vector<4x256xf32>
    %28 = vector.shape_cast %25 : vector<4x256xf32> to vector<1x4x256xf32>
    tpu.vector_store %arg4[%c0_9, %c0_10, %c0_11], %28 {strides = array<i32>} : memref<1x4x256xf32, #tpu.memory_space<vmem>>, vector<1x4x256xf32>,
    return
  }
  func.func @transform_0(%arg0: i32, %arg1: i32) -> (i32, i32, i32) {
    %c0_i32 = arith.constant 0 : i32
    %c0_i32_0 = arith.constant 0 : i32
    return %arg0, %c0_i32, %arg1 : i32, i32, i32
  }
  func.func @transform_1(%arg0: i32, %arg1: i32) -> (i32, i32, i32) {
    %c0_i32 = arith.constant 0 : i32
    %c0_i32_0 = arith.constant 0 : i32
    %c0_i32_1 = arith.constant 0 : i32
    return %arg0, %c0_i32, %c0_i32_0 : i32, i32, i32
  }
  func.func @transform_2(%arg0: i32, %arg1: i32) -> (i32, i32, i32) {
    %c0_i32 = arith.constant 0 : i32
    %c0_i32_0 = arith.constant 0 : i32
    return %arg0, %c0_i32, %arg1 : i32, i32, i32
  }
}

</mosaic_0001>

<llo_original>
// kernel: tpu_custom_call.1
$region0: #{tpu_custom_call.1}
  #allocation0 [shape = 'u32[]', space=smem, size = 0x4, offset = 0x4, fixed_abs, tag = 'smem constant byte address 0x4 - core index']
  #allocation1 [shape = 'u32[144,128]{1,0:T(1,128)}', space=vmem, size = 0x12000, scoped, tag = 'internal scratch']
  %s0 = inlined_call_operand.hbm [shape: f32[2,4,256], index: 0, kind: input, shape index: {}]
  %s1 = inlined_call_operand.vmem [shape: f32[2,4,2], index: 1, kind: input, shape index: {}]
  %s2 = inlined_call_operand.hbm [shape: f32[2,4,256], index: 2, kind: output, shape index: {}]
  %s3 = sld [smem:[#allocation0]]
  $region45: #{tpu_custom_call.1} parent=0
    _
  %s5 = ssub.s32 1, %s3
  %s6 = scalar_select 0, %s5, %s3
  $region1: #{tpu_custom_call.1} parent=0
    #allocation2 [shape = 'u8[8192]{0}', space=vmem, size = 0x2000, scoped, tag = 'input window, operand 0']
    #allocation3 [shape = 's32[2]{0}', space=sflag, size = 0x8, scoped, tag = 'scoped memory for tpu_custom_call.1']
    #allocation4 [shape = 's32[2]{0}', space=sflag, size = 0x8, scoped, tag = 'scoped memory for tpu_custom_call.1']
    #allocation5 [shape = 'u8[8192]{0}', space=vmem, size = 0x2000, scoped, tag = 'output window, operand 0']
    %7 = vsyncpa [#allocation3], 0
    %s8 = scalar_lea.sflag [#allocation3], 1
    %9 = vsyncpa %s8, 0
    %10 = vsyncpa [#allocation4], 0
    %s11 = scalar_lea.sflag [#allocation4], 1
    %12 = vsyncpa %s11, 0
    loop: start=0, step=1, limit=4
    $region2: #{tpu_custom_call.1} parent=1 // loop_pre_header
      _
    $region3: #{tpu_custom_call.1} parent=1 // loop_header
      %s14 = sphi 0, %s18
      %p15 = scmp.ge.s32.totalorder %s14, 4
      %s21 = sphi 0, %s33
      %s22 = sphi 0, %s29
      %s23 = sphi 0, %s21
      %s24 = sphi 0, %s22
      %s25 = sphi 0, %s23
      %s26 = sphi 0, %s24
      %s38 = sphi 0, %s40
      %s41 = sphi 0, %s38
      %s42 = sphi 0, %s41
      %s58 = sphi 0, %s42
      %s64 = sphi 0, %s66
      %s67 = sphi 0, %s64
      %s68 = sphi 0, %s67
      %s84 = sphi 0, %s68
      %s92 = sphi 0, %s94
      %s95 = sphi 0, %s92
      %s96 = sphi 0, %s95
      %s112 = sphi 0, %s96
    $region4: #{tpu_custom_call.1} parent=1 // loop_header_branch
      %17 = sbr.rel (%p15) target = $region8
    $region5: #{tpu_custom_call.1} parent=1 // loop_body
      %s19 = ssub.s32 %s14, 1
      %s20 = ssub.s32 %s14, 2
      %s27 = sadd.s32 1, %s22
      %p28 = scmp.ge.s32.totalorder %s27, 1
      %s29 = scalar_select %p28, 0, %s27
      %s30 = sadd.s32 1, %s21
      %s31 = scalar_select %p28, %s30, %s21
      %p32 = scmp.ge.s32.totalorder %s31, 2
      %s33 = scalar_select %p32, 0, %s31
      %s34 = ssub.s32 %s21, %s33
      %s35 = ssub.s32 %s22, %s29
      %s36 = sor.u32 %s34, %s35
      %p37 = scmp.eq.s32.totalorder %s36, 0
      %s39 = sadd.s32 %s38, 1
      %s40 = scalar_select %p37, %s38, %s39
      %p43 = pneg %p37
      %p44 = scmp.eq.s32.totalorder %s14, 1
      %p45 = por %p43, %p44
      %p46 = scmp.ne.s32.totalorder %s38, %s41
      %p47 = scmp.eq.s32.totalorder %s14, 0
      %p48 = por %p46, %p47
      %p49 = scmp.ne.s32.totalorder %s38, %s41
      %p50 = scmp.eq.s32.totalorder %s19, 1
      %p51 = por %p49, %p50
      %p52 = scmp.ne.s32.totalorder %s41, %s42
      %p53 = scmp.eq.s32.totalorder %s19, 0
      %p54 = por %p52, %p53
      %p55 = scmp.ne.s32.totalorder %s41, %s42
      %p56 = scmp.eq.s32.totalorder %s20, 1
      %p57 = por %p55, %p56
      %p59 = scmp.ne.s32.totalorder %s42, %s58
      %p60 = scmp.eq.s32.totalorder %s20, 0
      %p61 = por %p59, %p60
      %s62 = ssub.s32 %s21, %s33
      %p63 = scmp.eq.s32.totalorder %s62, 0
      %s65 = sadd.s32 %s64, 1
      %s66 = scalar_select %p63, %s64, %s65
      %p69 = pneg %p63
      %p70 = scmp.eq.s32.totalorder %s14, 1
      %p71 = por %p69, %p70
      %p72 = scmp.ne.s32.totalorder %s64, %s67
      %p73 = scmp.eq.s32.totalorder %s14, 0
      %p74 = por %p72, %p73
      %p75 = scmp.ne.s32.totalorder %s64, %s67
      %p76 = scmp.eq.s32.totalorder %s19, 1
      %p77 = por %p75, %p76
      %p78 = scmp.ne.s32.totalorder %s67, %s68
      %p79 = scmp.eq.s32.totalorder %s19, 0
      %p80 = por %p78, %p79
      %p81 = scmp.ne.s32.totalorder %s67, %s68
      %p82 = scmp.eq.s32.totalorder %s20, 1
      %p83 = por %p81, %p82
      %p85 = scmp.ne.s32.totalorder %s68, %s84
      %p86 = scmp.eq.s32.totalorder %s20, 0
      %p87 = por %p85, %p86
      %s88 = ssub.s32 %s21, %s33
      %s89 = ssub.s32 %s22, %s29
      %s90 = sor.u32 %s88, %s89
      %p91 = scmp.eq.s32.totalorder %s90, 0
      %s93 = sadd.s32 %s92, 1
      %s94 = scalar_select %p91, %s92, %s93
      %p97 = pneg %p91
      %p98 = scmp.eq.s32.totalorder %s14, 1
      %p99 = por %p97, %p98
      %p100 = scmp.ne.s32.totalorder %s92, %s95
      %p101 = scmp.eq.s32.totalorder %s14, 0
      %p102 = por %p100, %p101
      %p103 = scmp.ne.s32.totalorder %s92, %s95
      %p104 = scmp.eq.s32.totalorder %s19, 1
      %p105 = por %p103, %p104
      %p106 = scmp.ne.s32.totalorder %s95, %s96
      %p107 = scmp.eq.s32.totalorder %s19, 0
      %p108 = por %p106, %p107
      %p109 = scmp.ne.s32.totalorder %s95, %s96
      %p110 = scmp.eq.s32.totalorder %s20, 1
      %p111 = por %p109, %p110
      %p113 = scmp.ne.s32.totalorder %s96, %s112
      %p114 = scmp.eq.s32.totalorder %s20, 0
      %p115 = por %p113, %p114
      %p116 = scmp.le.s32.totalorder 1, %s14
      %p117 = scmp.lt.s32.totalorder %s14, 3
      %p118 = pnand %p116, %p117
      %p119 = pneg %p118
      // Predicated region
      $region9: #{tpu_custom_call.1} parent=5 // pred_check
        _
      $region10: #{tpu_custom_call.1} parent=5 // pred_check_branch
        %121 = sbr.rel (%p118) target = $region12
      $region11: #{tpu_custom_call.1} parent=5 // pred_region
        %s122 = ssub.s32 %s14, 1
      $region12: #{tpu_custom_call.1} parent=5 // pred_fallthru
        _
      %p123 = scmp.lt.s32.totalorder %s14, 2
      // Predicated region
      $region13: #{tpu_custom_call.1} parent=5 // pred_check
        %p124 = pneg %p123
      $region14: #{tpu_custom_call.1} parent=5 // pred_check_branch
        %126 = sbr.rel (%p124) target = $region16
      $region15: #{tpu_custom_call.1} parent=5 // pred_region
        // Predicated region
        $region17: #{tpu_custom_call.1} parent=15 // pred_check
          %p127 = pneg %p48
        $region18: #{tpu_custom_call.1} parent=15 // pred_check_branch
          %129 = sbr.rel (%p127) target = $region20
        $region19: #{tpu_custom_call.1} parent=15 // pred_region
          %s130 = sand.u32 %s38, 1
          %s131 = scalar_lea.sflag [#allocation3], %s130
          %s132 = sand.u32 %s38, 1
          %s133 = smul.addr %s132, 8
          %s134 = scalar_lea.vmem [#allocation2], %s133
          %s135 = smul.u32 2, %s22
          %s137 = ssub.s32 128, 128
          %138 = vsyncadd %s131, %s137
          %s139 = smul.addr %s21, 2
          %s140 = sadd.s32 %s135, %s139
          %s141 = smul.addr %s140, 64
          %s142 = scalar_lea.hbm %s0, %s141
          %s144 = sshll.u32 %s134, 4
          %s145 = int_to_ptr.vmem [resolvable:$true] %s144
          %147 = dma.hbm_to_vmem [thread:$0]  %s142, 128, %s145, %s131
        $region20: #{tpu_custom_call.1} parent=15 // pred_fallthru
          _
        // Predicated region
        $region21: #{tpu_custom_call.1} parent=15 // pred_check
          %p148 = pneg %p74
        $region22: #{tpu_custom_call.1} parent=15 // pred_check_branch
          %150 = sbr.rel (%p148) target = $region24
        $region23: #{tpu_custom_call.1} parent=15 // pred_region
          %p151 = scmp.lt.s32.totalorder %s21, 1
          %s152 = scalar_select %p151, %s21, 1
          %s153 = smul.addr %s152, 4
          %s154 = scalar_lea.vmem %s1, %s153
        $region24: #{tpu_custom_call.1} parent=15 // pred_fallthru
          _
      $region16: #{tpu_custom_call.1} parent=5 // pred_fallthru
        _
      %p155 = scmp.le.s32.totalorder 1, %s14
      %p156 = scmp.lt.s32.totalorder %s14, 3
      %p157 = pnand %p155, %p156
      %p158 = pneg %p157
      // Predicated region
      $region25: #{tpu_custom_call.1} parent=5 // pred_check
        _
      $region26: #{tpu_custom_call.1} parent=5 // pred_check_branch
        %160 = sbr.rel (%p157) target = $region28
      $region27: #{tpu_custom_call.1} parent=5 // pred_region
        %s161 = ssub.s32 %s14, 1
        %s162 = sand.u32 %s41, 1
        %s163 = scalar_lea.sflag [#allocation3], %s162
        %s164 = sand.u32 %s41, 1
        %s165 = smul.addr %s164, 8
        %s166 = scalar_lea.vmem [#allocation2], %s165
        // Predicated region
        $region29: #{tpu_custom_call.1} parent=27 // pred_check
          %p167 = pneg %p54
        $region30: #{tpu_custom_call.1} parent=27 // pred_check_branch
          %169 = sbr.rel (%p167) target = $region32
        $region31: #{tpu_custom_call.1} parent=27 // pred_region
          %170 = dma.done %s163, 128
        $region32: #{tpu_custom_call.1} parent=27 // pred_fallthru
          _
        %s171 = sand.u32 %s41, 1
        %s172 = scalar_lea.sflag [#allocation3], %s171
        %s173 = sand.u32 %s41, 1
        %s174 = smul.addr %s173, 8
        %s175 = scalar_lea.vmem [#allocation2], %s174
        %p176 = pneg %p54
        %p177 = pneg %p51
        %p178 = scmp.lt.s32.totalorder %s23, 1
        %s179 = scalar_select %p178, %s23, 1
        %s180 = smul.addr %s179, 4
        %s181 = scalar_lea.vmem %s1, %s180
        %p182 = pneg %p80
        %p183 = pneg %p77
        %p184 = pneg %p108
        %p185 = pneg %p105
        %s186 = sand.u32 %s95, 1
        %s187 = scalar_lea.sflag [#allocation4], %s186
        %s188 = sand.u32 %s95, 1
        %s189 = smul.addr %s188, 8
        %s190 = scalar_lea.vmem [#allocation5], %s189
        %s191 = smul.u32 2, %s24
        %p192 = scmp.lt.s32.totalorder %s23, 1
        %s193 = scalar_select %p192, %s23, 1
        %s194 = smul.addr %s193, 4
        %s195 = scalar_lea.vmem %s1, %s194
        %s196 = smul.u32 2, %s24
        %v197 = vld [vmem:[%s166] sm:$0xff]
        %v199 = vcombine.high %v197, %v197
        %vm201 = vcmask 1043456
        %v202 = vsel %vm201, %v197, 0.0
        %v203 = vrot.slane %v202, 4
        %v204 = vadd.f32 %v202, %v203
        %v205 = vrot.slane %v204, 2
        %v206 = vadd.f32 %v204, %v205
        %v207 = vrot.slane %v206, 1
        %v208 = vadd.f32 %v206, %v207
        %v209 = vsel %vm201, %v199, 0.0
        %v210 = vrot.slane %v209, 4
        %v211 = vadd.f32 %v209, %v210
        %v212 = vrot.slane %v211, 2
        %v213 = vadd.f32 %v211, %v212
        %v214 = vrot.slane %v213, 1
        %v215 = vadd.f32 %v213, %v214
        %v216 = vmul.f32 %v208, 0.25
        %v217 = vmul.f32 %v215, 0.25
        %v220 = vcombine.low %v216, %v217
        %v222 = vsub.f32 %v197, %v220
        %v223 = vmul.f32 %v222, %v222
        %v225 = vcombine.high %v223, %v223
        %v227 = vsel %vm201, %v223, 0.0
        %v228 = vrot.slane %v227, 4
        %v229 = vadd.f32 %v227, %v228
        %v230 = vrot.slane %v229, 2
        %v231 = vadd.f32 %v229, %v230
        %v232 = vrot.slane %v231, 1
        %v233 = vadd.f32 %v231, %v232
        %v234 = vsel %vm201, %v225, 0.0
        %v235 = vrot.slane %v234, 4
        %v236 = vadd.f32 %v234, %v235
        %v237 = vrot.slane %v236, 2
        %v238 = vadd.f32 %v236, %v237
        %v239 = vrot.slane %v238, 1
        %v240 = vadd.f32 %v238, %v239
        %v241 = vmul.f32 %v233, 0.25
        %v242 = vmul.f32 %v240, 0.25
        %v243 = vadd.f32 %v241, 1e-06
        %v244 = vadd.f32 %v242, 1e-06
        %v245 = vrsqrt.pop %v243
        %v246 = vrsqrt.pop %v244
        %v247 = vld [vmem:[%s195] sm:$0xf]
        %249 = vset.pattern.permute.xlu0 0
        %250 = vperm.xlu0 %249, %v247
        %v251 = vpop.permute.xlu0 %250
        %v253 = vmul.f32 %v251, %v245
        %v254 = vmul.f32 %v251, %v246
        %v257 = vcombine.low %v253, %v254
        %v259 = vmul.f32 %v222, %v257
        %260 = vset.pattern.permute.xlu0 1
        %261 = vperm.xlu0 %260, %v247
        %v262 = vpop.permute.xlu0 %261
        %v264 = vunpack.c.l.s4 839922192
        %v265 = vunpack.c.0.s8 %v264
        %v266 = vlaneseq
        %v267 = vshrl.u32 %v266, 7
        %v268 = vsub.s32 %v265, %v267
        %v269 = vrot.slane %v262, %v268
        %v271 = vadd.f32 %v259, %v269
        %272 = vst [vmem:[%s190] sm:$0xff] %v271
        %s273 = sand.u32 %s95, 1
        %s274 = scalar_lea.sflag [#allocation4], %s273
        %s275 = sand.u32 %s95, 1
        %s276 = smul.addr %s275, 8
        %s277 = scalar_lea.vmem [#allocation5], %s276
        // Predicated region
        $region33: #{tpu_custom_call.1} parent=27 // pred_check
          %p278 = pneg %p105
        $region34: #{tpu_custom_call.1} parent=27 // pred_check_branch
          %280 = sbr.rel (%p278) target = $region36
        $region35: #{tpu_custom_call.1} parent=27 // pred_region
          %s281 = smul.u32 2, %s24
          %s283 = ssub.s32 128, 128
          %284 = vsyncadd %s274, %s283
          %s285 = smul.addr %s23, 2
          %s286 = sadd.s32 %s281, %s285
          %s287 = smul.addr %s286, 64
          %s288 = scalar_lea.hbm %s2, %s287
          %s290 = sshll.u32 %s277, 4
          %s291 = int_to_ptr.vmem [resolvable:$true] %s290
          %293 = dma.vmem_to_hbm [thread:$0]  %s291, 128, %s288, %s274
        $region36: #{tpu_custom_call.1} parent=27 // pred_fallthru
          _
      $region28: #{tpu_custom_call.1} parent=5 // pred_fallthru
        _
      %p294 = scmp.le.s32.totalorder 2, %s14
      // Predicated region
      $region37: #{tpu_custom_call.1} parent=5 // pred_check
        %p295 = pneg %p294
      $region38: #{tpu_custom_call.1} parent=5 // pred_check_branch
        %297 = sbr.rel (%p295) target = $region40
      $region39: #{tpu_custom_call.1} parent=5 // pred_region
        %s298 = ssub.s32 %s14, 2
        // Predicated region
        $region41: #{tpu_custom_call.1} parent=39 // pred_check
          %p299 = pneg %p111
        $region42: #{tpu_custom_call.1} parent=39 // pred_check_branch
          %301 = sbr.rel (%p299) target = $region44
        $region43: #{tpu_custom_call.1} parent=39 // pred_region
          %s302 = sand.u32 %s96, 1
          %s303 = scalar_lea.sflag [#allocation4], %s302
          %s304 = sand.u32 %s96, 1
          %s305 = smul.addr %s304, 8
          %s306 = scalar_lea.vmem [#allocation5], %s305
          %307 = dma.done %s303, 128
        $region44: #{tpu_custom_call.1} parent=39 // pred_fallthru
          _
      $region40: #{tpu_custom_call.1} parent=5 // pred_fallthru
        _
    $region6: #{tpu_custom_call.1} parent=1 // loop_footer
      %s18 = sadd.s32 1, %s14
    $region7: #{tpu_custom_call.1} parent=1 // loop_footer_branch
      %13 = sbr.rel target = $region3
    $region8: #{tpu_custom_call.1} parent=1 // loop_exit
      _
    %308 = vsyncpa [#allocation3], 1
    %s309 = scalar_lea.sflag [#allocation3], 1
    %310 = vsyncpa %s309, 1
    %311 = vsyncpa [#allocation4], 1
    %s312 = scalar_lea.sflag [#allocation4], 1
    %313 = vsyncpa %s312, 1

</llo_original>
